<compile_context>
chip_gen: v5e
topology: v5e:2x2
jax: 0.10.0
libtpu: 0.0.40
codegen_flags: <defaults>
</compile_context>

<pallas_src>
import functools

import jax
import jax.numpy as jnp
from jax.experimental import pallas as pl
from jax.experimental.pallas import tpu as pltpu


def _round_up(a, b):
    return ((a + b - 1) // b) * b


def mlp_kernel(x_ref, w1_ref, b1_ref, w2_ref, b2_ref, g_ref, beta_ref,
               o_ref, acc_ref, *, eps, e_true, e_pad):
    # Grid: axis 0 = M row tiles ("parallel"), axis 1 = H chunks ("arbitrary",
    # the reduction axis for the second matmul).
    h_idx = pl.program_id(1)

    @pl.when(h_idx == 0)
    def _():
        acc_ref[...] = jnp.zeros_like(acc_ref)

    x_raw = x_ref[...]
    x_mxu = x_raw.astype(w1_ref.dtype)           # bf16 operand for the MXU

    # linear1 chunk (+ bias) and ReLU.  ReLU is elementwise over H, so doing
    # it per H-chunk before the second matmul contribution is exact.
    h_blk = jnp.dot(x_mxu, w1_ref[...], preferred_element_type=jnp.float32)
    h_blk = jnp.maximum(h_blk + b1_ref[...], 0.0)

    # Partial linear2 contribution of this H chunk, accumulated in f32.
    acc_ref[...] += jnp.dot(h_blk.astype(w2_ref.dtype), w2_ref[...],
                            preferred_element_type=jnp.float32)

    @pl.when(h_idx == pl.num_programs(1) - 1)
    def _():
        x_f32 = x_raw.astype(jnp.float32)
        y = acc_ref[...] + b2_ref[...]
        # dropout: eval-mode semantics (identity).
        # TODO(synk): training-mode dropout (p=0.1) would need pltpu.prng_seed
        #             + prng_random_bits masking plus 1/(1-p) scaling.
        r = y + x_f32

        # LayerNorm over the TRUE embedding width.  When E is lane-padded, the
        # padded columns of r are exactly zero (zero-padded x, W2 columns, b2),
        # so sums divided by e_true give correct statistics; padded output
        # lanes are zeroed by the zero-padded gamma/beta and sliced off by the
        # caller (do not remove that slice).
        if e_pad == e_true:
            mean = jnp.mean(r, axis=-1, keepdims=True)
            c = r - mean
            var = jnp.mean(c * c, axis=-1, keepdims=True)
        else:
            inv_e = 1.0 / float(e_true)
            mean = jnp.sum(r, axis=-1, keepdims=True) * inv_e
            lane = jax.lax.broadcasted_iota(jnp.int32, r.shape, 1)
            c = jnp.where(lane < e_true, r - mean, 0.0)
            var = jnp.sum(c * c, axis=-1, keepdims=True) * inv_e
        inv = jax.lax.rsqrt(var + eps)
        out = c * inv * g_ref[...] + beta_ref[...]
        o_ref[...] = out.astype(o_ref.dtype)


def mlp_forward(x, w1, b1, w2, b2, gamma, beta, *, eps=1e-5, tm=None, th=None,
                mxu_dtype=jnp.bfloat16):
    """x: [B, S, E] -> [B, S, E].  w1: [E, H], w2: [H, E]."""
    B, S, E = x.shape
    assert w1.shape[0] == E and w2.shape[1] == E
    H = w1.shape[1]
    M = B * S
    itemsize = jnp.dtype(x.dtype).itemsize

    # ---- chip-dependent budgets -------------------------------------------
    try:
        vmem_cap = int(pltpu.get_tpu_info().vmem_capacity_bytes)
    except Exception:
        vmem_cap = 64 << 20                      # unknown chip: be conservative
    small_vmem = vmem_cap < (96 << 20)           # v7x-class: 64 MiB/TC, 2 TCs
    # Leave headroom for compiler-internal scratch: ~48 MiB on the 64 MiB chip,
    # ~100 MiB on the 128 MiB chips (v5e/v6e).
    vmem_limit = (48 << 20) if small_vmem else (100 << 20)

    # ---- lane-dense padding of the feature axes ---------------------------
    LANE = 128
    E_pad = _round_up(E, LANE)
    H_pad = _round_up(H, LANE)
    if th is None:
        th = H_pad if H_pad <= 1024 else 512     # stream H in 512-wide chunks
    th = _round_up(min(th, H_pad), LANE)
    H_pad = _round_up(H_pad, th)

    # ---- row tile: derived from the VMEM budget ---------------------------
    if tm is None:
        tm = 256 if small_vmem else 512
    tm = _round_up(tm, 8)

    def _vmem_bytes(tm_):
        stream = 2 * (tm_ * E_pad * itemsize) * 2       # x in + out, 2-buffered
        wts = 2 * (E_pad * th + th * E_pad) * 2         # bf16 W1+W2 chunks, 2-buf
        acc = tm_ * E_pad * 4                           # f32 accumulator scratch
        inter = tm_ * th * (4 + 2)                      # f32 h chunk + bf16 copy
        small = 2 * th * 4 + 3 * E_pad * 4              # b1 chunk, b2, gamma, beta
        return stream + wts + acc + inter + small

    while _vmem_bytes(tm) > int(0.85 * vmem_limit) and tm > 64:
        tm = max(64, tm // 2)

    if small_vmem and M > 8:
        # Only the v7x-class chip has 2 TensorCores: keep >=2 grid steps along
        # the parallel M axis so both cores get work.  Single-TC chips use the
        # full tile (halving it there only adds pipeline overhead).
        tm = min(tm, _round_up(pl.cdiv(M, 2), 8))
    tm = max(8, min(tm, _round_up(M, 8)))
    M_pad = _round_up(M, tm)

    # ---- host-side padding / casting (done once, not per grid step) -------
    x2 = x.reshape(M, E)
    if (M_pad, E_pad) != (M, E):
        # Padded rows run LayerNorm over all-zero rows (var=0, rsqrt(eps)
        # finite) — harmless, they are sliced off below.
        x2 = jnp.pad(x2, ((0, M_pad - M), (0, E_pad - E)))
    w1_m = jnp.pad(w1, ((0, E_pad - E), (0, H_pad - H))).astype(mxu_dtype)
    w2_m = jnp.pad(w2, ((0, H_pad - H), (0, E_pad - E))).astype(mxu_dtype)
    b1_2 = jnp.pad(b1.astype(jnp.float32), (0, H_pad - H)).reshape(1, H_pad)
    b2_2 = jnp.pad(b2.astype(jnp.float32), (0, E_pad - E)).reshape(1, E_pad)
    g_2 = jnp.pad(gamma.astype(jnp.float32), (0, E_pad - E)).reshape(1, E_pad)
    beta_2 = jnp.pad(beta.astype(jnp.float32), (0, E_pad - E)).reshape(1, E_pad)

    grid = (M_pad // tm, H_pad // th)
    n_m = grid[0]

    # Advisory cost estimate (weights are re-streamed once per M tile).
    flops = 2 * M_pad * E_pad * H_pad * 2
    bytes_accessed = (
        M_pad * E_pad * itemsize * 2                      # x in + out
        + n_m * 2 * E_pad * H_pad * 2                     # streamed bf16 W1+W2
        + H_pad * 4 + 3 * E_pad * 4)                      # biases / LN params
    cost = pl.CostEstimate(flops=flops, transcendentals=M_pad,
                           bytes_accessed=bytes_accessed)

    kernel = functools.partial(mlp_kernel, eps=eps, e_true=E, e_pad=E_pad)

    out2 = pl.pallas_call(
        kernel,
        out_shape=jax.ShapeDtypeStruct((M_pad, E_pad), x.dtype),
        grid_spec=pltpu.PrefetchScalarGridSpec(
            num_scalar_prefetch=0,
            grid=grid,
            in_specs=[
                pl.BlockSpec((tm, E_pad), lambda i, h: (i, 0)),    # x row tile
                pl.BlockSpec((E_pad, th), lambda i, h: (0, h)),    # W1 chunk
                pl.BlockSpec((1, th), lambda i, h: (0, h)),        # b1 chunk
                pl.BlockSpec((th, E_pad), lambda i, h: (h, 0)),    # W2 chunk
                # Constant-index operands: single buffer is enough.
                pl.BlockSpec((1, E_pad), lambda i, h: (0, 0),
                             pipeline_mode=pl.Buffered(1)),        # b2
                pl.BlockSpec((1, E_pad), lambda i, h: (0, 0),
                             pipeline_mode=pl.Buffered(1)),        # gamma
                pl.BlockSpec((1, E_pad), lambda i, h: (0, 0),
                             pipeline_mode=pl.Buffered(1)),        # beta
            ],
            out_specs=pl.BlockSpec((tm, E_pad), lambda i, h: (i, 0)),
            scratch_shapes=[pltpu.VMEM((tm, E_pad), jnp.float32)],
        ),
        compiler_params=pltpu.CompilerParams(
            dimension_semantics=("parallel", "arbitrary"),
            vmem_limit_bytes=vmem_limit),
        cost_estimate=cost,
    )(x2, w1_m, b1_2, w2_m, b2_2, g_2, beta_2)

    if (M_pad, E_pad) != (M, E):
        out2 = out2[:M, :E]
    return out2.reshape(B, S, E)


if __name__ == "__main__":
    # Small, PyTorch-consistent shapes: batch=2, seq=8, embedding_dim=128,
    # hidden_dim=256 (lane-aligned stand-ins for the defaults).
    B, S, E, H = 2, 8, 128, 256

    key = jax.random.PRNGKey(0)
    kx, k1, k2, k3, k4 = jax.random.split(key, 5)

    x = jax.random.normal(kx, (B, S, E), dtype=jnp.float32)

    # Deterministic parameter init (uniform, like nn.Linear's default scale).
    w1 = jax.random.uniform(k1, (E, H), jnp.float32, -1.0, 1.0) / jnp.sqrt(E)
    b1 = jax.random.uniform(k2, (H,), jnp.float32, -1.0, 1.0) / jnp.sqrt(E)
    w2 = jax.random.uniform(k3, (H, E), jnp.float32, -1.0, 1.0) / jnp.sqrt(H)
    b2 = jax.random.uniform(k4, (E,), jnp.float32, -1.0, 1.0) / jnp.sqrt(H)
    gamma = jnp.ones((E,), jnp.float32)   # nn.LayerNorm default weight
    beta = jnp.zeros((E,), jnp.float32)   # nn.LayerNorm default bias

    out = mlp_forward(x, w1, b1, w2, b2, gamma, beta)
    jax.block_until_ready(out)

    # Pure-JAX reference with matching mixed precision:
    # bf16 matmul operands, f32 accumulation, f32 residual + LayerNorm,
    # eval-mode dropout (identity).
    to_bf = lambda a: a.astype(jnp.bfloat16).astype(jnp.float32)
    h_ref = jnp.maximum(to_bf(x) @ to_bf(w1) + b1, 0.0)
    y_ref = to_bf(h_ref) @ to_bf(w2) + b2
    r_ref = y_ref + x
    mu = r_ref.mean(-1, keepdims=True)
    var = ((r_ref - mu) ** 2).mean(-1, keepdims=True)
    ref = (r_ref - mu) * jax.lax.rsqrt(var + 1e-5) * gamma + beta
    assert jnp.allclose(out, ref, atol=2e-3, rtol=2e-3), "mismatch vs reference"

    print("KERNEL_OK")
</pallas_src>

<mosaic_0001>
module attributes {stable_mosaic.version = 11 : i64} {
  func.func @mlp_kernel(%arg0: i32, %arg1: i32, %arg2: memref<8x128xf32, #tpu.memory_space<vmem>>, %arg3: memref<128x256xbf16, #tpu.memory_space<vmem>>, %arg4: memref<1x256xf32, #tpu.memory_space<vmem>>, %arg5: memref<256x128xbf16, #tpu.memory_space<vmem>>, %arg6: memref<1x128xf32, #tpu.memory_space<vmem>>, %arg7: memref<1x128xf32, #tpu.memory_space<vmem>>, %arg8: memref<1x128xf32, #tpu.memory_space<vmem>>, %arg9: memref<8x128xf32, #tpu.memory_space<vmem>>, %arg10: memref<8x128xf32, #tpu.memory_space<vmem>>) attributes {dimension_semantics = [#tpu.dimension_semantics<parallel>, #tpu.dimension_semantics<arbitrary>], iteration_bounds = array<i64: 2, 1>, scalar_prefetch = 0 : i64, scratch_operands = 1 : i64, tpu.core_type = #tpu.core_type<tc>, window_params = [{transform_indices = @transform_0, window_bounds = array<i64: 8, 128>}, {transform_indices = @transform_1, window_bounds = array<i64: 128, 256>}, {transform_indices = @transform_2, window_bounds = array<i64: 1, 256>}, {transform_indices = @transform_3, window_bounds = array<i64: 256, 128>}, {pipeline_mode = #tpu.pipeline_mode<synchronous>, transform_indices = @transform_4, window_bounds = array<i64: 1, 128>}, {pipeline_mode = #tpu.pipeline_mode<synchronous>, transform_indices = @transform_5, window_bounds = array<i64: 1, 128>}, {pipeline_mode = #tpu.pipeline_mode<synchronous>, transform_indices = @transform_6, window_bounds = array<i64: 1, 128>}, {transform_indices = @transform_7, window_bounds = array<i64: 8, 128>}]} {
    %c0_i32 = arith.constant 0 : i32
    %0 = arith.cmpi eq, %arg1, %c0_i32 : i32
    %1 = arith.extui %0 : i1 to i32
    %c0_i32_0 = arith.constant 0 : i32
    %2 = arith.cmpi ne, %1, %c0_i32_0 : i32
    scf.if %2 {
      %cst_16 = arith.constant 0.000000e+00 : f32
      %21 = vector.broadcast %cst_16 : f32 to vector<8x128xf32>
      %c0_17 = arith.constant 0 : index
      %c0_18 = arith.constant 0 : index
      %22 = vector.load %arg10[%c0_17, %c0_18] : memref<8x128xf32, #tpu.memory_space<vmem>>, vector<8x128xf32>
      tpu.vector_store %arg10[%c0_17, %c0_18], %21 {strides = array<i32>} : memref<8x128xf32, #tpu.memory_space<vmem>>, vector<8x128xf32>,
    } else {
    }
    %c0 = arith.constant 0 : index
    %c0_1 = arith.constant 0 : index
    %3 = vector.load %arg2[%c0, %c0_1] : memref<8x128xf32, #tpu.memory_space<vmem>>, vector<8x128xf32>
    %4 = arith.truncf %3 : vector<8x128xf32> to vector<8x128xbf16>
    %c0_2 = arith.constant 0 : index
    %c0_3 = arith.constant 0 : index
    %5 = vector.load %arg3[%c0_2, %c0_3] : memref<128x256xbf16, #tpu.memory_space<vmem>>, vector<128x256xbf16>
    %cst = arith.constant dense<0.000000e+00> : vector<8x256xf32>
    %6 = tpu.matmul %4, %5, %cst {dimension_numbers = #tpu.dot_dimension_numbers<[1], [0], [0], [1], [0, 0, 1, 1], [], []>} : vector<8x128xbf16>, vector<128x256xbf16>, vector<8x256xf32> -> vector<8x256xf32>
    %c0_4 = arith.constant 0 : index
    %c0_5 = arith.constant 0 : index
    %7 = vector.load %arg4[%c0_4, %c0_5] : memref<1x256xf32, #tpu.memory_space<vmem>>, vector<1x256xf32>
    %8 = vector.broadcast %7 : vector<1x256xf32> to vector<8x256xf32>
    %9 = arith.addf %6, %8 : vector<8x256xf32>
    %cst_6 = arith.constant 0.000000e+00 : f32
    %10 = vector.broadcast %cst_6 : f32 to vector<8x256xf32>
    %11 = arith.maximumf %9, %10 : vector<8x256xf32>
    %c0_7 = arith.constant 0 : index
    %c0_8 = arith.constant 0 : index
    %12 = vector.load %arg10[%c0_7, %c0_8] : memref<8x128xf32, #tpu.memory_space<vmem>>, vector<8x128xf32>
    %13 = arith.truncf %11 : vector<8x256xf32> to vector<8x256xbf16>
    %c0_9 = arith.constant 0 : index
    %c0_10 = arith.constant 0 : index
    %14 = vector.load %arg5[%c0_9, %c0_10] : memref<256x128xbf16, #tpu.memory_space<vmem>>, vector<256x128xbf16>
    %cst_11 = arith.constant dense<0.000000e+00> : vector<8x128xf32>
    %15 = tpu.matmul %13, %14, %cst_11 {dimension_numbers = #tpu.dot_dimension_numbers<[1], [0], [0], [1], [0, 0, 1, 1], [], []>} : vector<8x256xbf16>, vector<256x128xbf16>, vector<8x128xf32> -> vector<8x128xf32>
    %16 = arith.addf %12, %15 : vector<8x128xf32>
    %c0_12 = arith.constant 0 : index
    %c0_13 = arith.constant 0 : index
    %17 = vector.load %arg10[%c0_12, %c0_13] : memref<8x128xf32, #tpu.memory_space<vmem>>, vector<8x128xf32>
    tpu.vector_store %arg10[%c0_12, %c0_13], %16 {strides = array<i32>} : memref<8x128xf32, #tpu.memory_space<vmem>>, vector<8x128xf32>,
    %c0_i32_14 = arith.constant 0 : i32
    %18 = arith.cmpi eq, %arg1, %c0_i32_14 : i32
    %19 = arith.extui %18 : i1 to i32
    %c0_i32_15 = arith.constant 0 : i32
    %20 = arith.cmpi ne, %19, %c0_i32_15 : i32
    scf.if %20 {
      %c0_16 = arith.constant 0 : index
      %c0_17 = arith.constant 0 : index
      %21 = vector.load %arg10[%c0_16, %c0_17] : memref<8x128xf32, #tpu.memory_space<vmem>>, vector<8x128xf32>
      %c0_18 = arith.constant 0 : index
      %c0_19 = arith.constant 0 : index
      %22 = vector.load %arg6[%c0_18, %c0_19] : memref<1x128xf32, #tpu.memory_space<vmem>>, vector<1x128xf32>
      %23 = vector.broadcast %22 : vector<1x128xf32> to vector<8x128xf32>
      %24 = arith.addf %21, %23 : vector<8x128xf32>
      %25 = arith.addf %24, %3 : vector<8x128xf32>
      %cst_20 = arith.constant dense<0.000000e+00> : vector<8xf32>
      %26 = vector.multi_reduction <add>, %25, %cst_20 [1] : vector<8x128xf32> to vector<8xf32>
      %27 = vector.shape_cast %26 : vector<8xf32> to vector<8x1xf32>
      %cst_21 = arith.constant 1.280000e+02 : f32
      %28 = vector.broadcast %cst_21 : f32 to vector<8x1xf32>
      %29 = arith.divf %27, %28 : vector<8x1xf32>
      %30 = vector.broadcast %29 : vector<8x1xf32> to vector<8x128xf32>
      %31 = arith.subf %25, %30 : vector<8x128xf32>
      %32 = arith.mulf %31, %31 : vector<8x128xf32>
      %cst_22 = arith.constant dense<0.000000e+00> : vector<8xf32>
      %33 = vector.multi_reduction <add>, %32, %cst_22 [1] : vector<8x128xf32> to vector<8xf32>
      %34 = vector.shape_cast %33 : vector<8xf32> to vector<8x1xf32>
      %cst_23 = arith.constant 1.280000e+02 : f32
      %35 = vector.broadcast %cst_23 : f32 to vector<8x1xf32>
      %36 = arith.divf %34, %35 : vector<8x1xf32>
      %cst_24 = arith.constant 9.99999974E-6 : f32
      %37 = vector.broadcast %cst_24 : f32 to vector<8x1xf32>
      %38 = arith.addf %36, %37 : vector<8x1xf32>
      %39 = math.rsqrt %38 : vector<8x1xf32>
      %40 = vector.broadcast %39 : vector<8x1xf32> to vector<8x128xf32>
      %41 = arith.mulf %31, %40 : vector<8x128xf32>
      %c0_25 = arith.constant 0 : index
      %c0_26 = arith.constant 0 : index
      %42 = vector.load %arg7[%c0_25, %c0_26] : memref<1x128xf32, #tpu.memory_space<vmem>>, vector<1x128xf32>
      %43 = vector.broadcast %42 : vector<1x128xf32> to vector<8x128xf32>
      %44 = arith.mulf %41, %43 : vector<8x128xf32>
      %c0_27 = arith.constant 0 : index
      %c0_28 = arith.constant 0 : index
      %45 = vector.load %arg8[%c0_27, %c0_28] : memref<1x128xf32, #tpu.memory_space<vmem>>, vector<1x128xf32>
      %46 = vector.broadcast %45 : vector<1x128xf32> to vector<8x128xf32>
      %47 = arith.addf %44, %46 : vector<8x128xf32>
      %c0_29 = arith.constant 0 : index
      %c0_30 = arith.constant 0 : index
      %48 = vector.load %arg9[%c0_29, %c0_30] : memref<8x128xf32, #tpu.memory_space<vmem>>, vector<8x128xf32>
      tpu.vector_store %arg9[%c0_29, %c0_30], %47 {strides = array<i32>} : memref<8x128xf32, #tpu.memory_space<vmem>>, vector<8x128xf32>,
    } else {
    }
    return
  }
  func.func @transform_0(%arg0: i32, %arg1: i32) -> (i32, i32) {
    %c0_i32 = arith.constant 0 : i32
    %c0_i32_0 = arith.constant 0 : i32
    return %arg0, %c0_i32 : i32, i32
  }
  func.func @transform_1(%arg0: i32, %arg1: i32) -> (i32, i32) {
    %c0_i32 = arith.constant 0 : i32
    %c0_i32_0 = arith.constant 0 : i32
    return %c0_i32, %arg1 : i32, i32
  }
  func.func @transform_2(%arg0: i32, %arg1: i32) -> (i32, i32) {
    %c0_i32 = arith.constant 0 : i32
    %c0_i32_0 = arith.constant 0 : i32
    return %c0_i32, %arg1 : i32, i32
  }
  func.func @transform_3(%arg0: i32, %arg1: i32) -> (i32, i32) {
    %c0_i32 = arith.constant 0 : i32
    %c0_i32_0 = arith.constant 0 : i32
    return %arg1, %c0_i32 : i32, i32
  }
  func.func @transform_4(%arg0: i32, %arg1: i32) -> (i32, i32) {
    %c0_i32 = arith.constant 0 : i32
    %c0_i32_0 = arith.constant 0 : i32
    %c0_i32_1 = arith.constant 0 : i32
    return %c0_i32, %c0_i32_0 : i32, i32
  }
  func.func @transform_5(%arg0: i32, %arg1: i32) -> (i32, i32) {
    %c0_i32 = arith.constant 0 : i32
    %c0_i32_0 = arith.constant 0 : i32
    %c0_i32_1 = arith.constant 0 : i32
    return %c0_i32, %c0_i32_0 : i32, i32
  }
  func.func @transform_6(%arg0: i32, %arg1: i32) -> (i32, i32) {
    %c0_i32 = arith.constant 0 : i32
    %c0_i32_0 = arith.constant 0 : i32
    %c0_i32_1 = arith.constant 0 : i32
    return %c0_i32, %c0_i32_0 : i32, i32
  }
  func.func @transform_7(%arg0: i32, %arg1: i32) -> (i32, i32) {
    %c0_i32 = arith.constant 0 : i32
    %c0_i32_0 = arith.constant 0 : i32
    return %arg0, %c0_i32 : i32, i32
  }
}

</mosaic_0001>

<llo_original>
// kernel: tpu_custom_call.1
$region0: #{tpu_custom_call.1}
  #allocation0 [shape = 'u32[]', space=smem, size = 0x4, offset = 0x4, fixed_abs, tag = 'smem constant byte address 0x4 - core index']
  #allocation1 [shape = 'u32[72,128]{1,0:T(1,128)}', space=vmem, size = 0x9000, scoped, tag = 'internal scratch']
  #allocation2 [shape = 'f32[8,128]{1,0:T(8,128)}', space=vmem, size = 0x1000, scoped, tag = 'scratch operand']
  %s0 = inlined_call_operand.hbm [shape: f32[16,128], index: 0, kind: input, shape index: {}]
  %s1 = inlined_call_operand.hbm [shape: bf16[128,256], index: 1, kind: input, shape index: {}]
  %s2 = inlined_call_operand.hbm [shape: f32[1,256], index: 2, kind: input, shape index: {}]
  %s3 = inlined_call_operand.hbm [shape: bf16[256,128], index: 3, kind: input, shape index: {}]
  %s4 = inlined_call_operand.vmem [shape: f32[1,128], index: 4, kind: input, shape index: {}]
  %s5 = inlined_call_operand.vmem [shape: f32[1,128], index: 5, kind: input, shape index: {}]
  %s6 = inlined_call_operand.vmem [shape: f32[1,128], index: 6, kind: input, shape index: {}]
  %s7 = inlined_call_operand.hbm [shape: f32[16,128], index: 7, kind: output, shape index: {}]
  %s8 = sld [smem:[#allocation0]]
  $region85: #{tpu_custom_call.1} parent=0
    _
  %s10 = ssub.s32 1, %s8
  %s11 = scalar_select 0, %s10, %s8
  $region1: #{tpu_custom_call.1} parent=0
    #allocation3 [shape = 'u8[8192]{0}', space=vmem, size = 0x2000, scoped, tag = 'input window, operand 0']
    #allocation4 [shape = 's32[2]{0}', space=sflag, size = 0x8, scoped, tag = 'scoped memory for tpu_custom_call.1']
    #allocation5 [shape = 's32[2]{0}', space=sflag, size = 0x8, scoped, tag = 'scoped memory for tpu_custom_call.1']
    #allocation6 [shape = 'u8[65536]{0}', space=vmem, size = 0x10000, scoped, tag = 'input window, operand 1, single buffered']
    #allocation7 [shape = 's32[1]{0}', space=sflag, size = 0x4, scoped, tag = 'scoped memory for tpu_custom_call.1']
    #allocation8 [shape = 'u8[1024]{0}', space=vmem, size = 0x400, scoped, tag = 'input window, operand 2, single buffered']
    #allocation9 [shape = 'u8[65536]{0}', space=vmem, size = 0x10000, scoped, tag = 'input window, operand 3, single buffered']
    #allocation10 [shape = 's32[1]{0}', space=sflag, size = 0x4, scoped, tag = 'scoped memory for tpu_custom_call.1']
    #allocation11 [shape = 'u8[8192]{0}', space=vmem, size = 0x2000, scoped, tag = 'output window, operand 0']
    %12 = vsyncpa [#allocation4], 0
    %s13 = scalar_lea.sflag [#allocation4], 1
    %14 = vsyncpa %s13, 0
    %15 = vsyncpa [#allocation7], 0
    %16 = vsyncpa [#allocation10], 0
    %17 = vsyncpa [#allocation5], 0
    %s18 = scalar_lea.sflag [#allocation5], 1
    %19 = vsyncpa %s18, 0
    loop: start=0, step=1, limit=4
    $region2: #{tpu_custom_call.1} parent=1 // loop_pre_header
      _
    $region3: #{tpu_custom_call.1} parent=1 // loop_header
      %s21 = sphi 0, %s25
      %p22 = scmp.ge.s32.totalorder %s21, 4
      %s28 = sphi 0, %s40
      %s29 = sphi 0, %s36
      %s30 = sphi 0, %s28
      %s31 = sphi 0, %s29
      %s32 = sphi 0, %s30
      %s33 = sphi 0, %s31
      %s43 = sphi 0, %s45
      %s46 = sphi 0, %s43
      %s47 = sphi 0, %s46
      %s63 = sphi 0, %s47
      %s69 = sphi 0, %s71
      %s72 = sphi 0, %s69
      %s73 = sphi 0, %s72
      %s89 = sphi 0, %s73
      %s95 = sphi 0, %s97
      %s98 = sphi 0, %s95
      %s99 = sphi 0, %s98
      %s115 = sphi 0, %s99
      %s121 = sphi 0, %s123
      %s124 = sphi 0, %s121
      %s125 = sphi 0, %s124
      %s141 = sphi 0, %s125
      %s145 = sphi 0, %s145
      %s147 = sphi 0, %s145
      %s148 = sphi 0, %s147
      %s162 = sphi 0, %s148
      %s166 = sphi 0, %s166
      %s168 = sphi 0, %s166
      %s169 = sphi 0, %s168
      %s183 = sphi 0, %s169
      %s187 = sphi 0, %s187
      %s189 = sphi 0, %s187
      %s190 = sphi 0, %s189
      %s204 = sphi 0, %s190
      %s210 = sphi 0, %s212
      %s213 = sphi 0, %s210
      %s214 = sphi 0, %s213
      %s230 = sphi 0, %s214
    $region4: #{tpu_custom_call.1} parent=1 // loop_header_branch
      %24 = sbr.rel (%p22) target = $region8
    $region5: #{tpu_custom_call.1} parent=1 // loop_body
      %s26 = ssub.s32 %s21, 1
      %s27 = ssub.s32 %s21, 2
      %s34 = sadd.s32 1, %s29
      %p35 = scmp.ge.s32.totalorder %s34, 1
      %s36 = scalar_select %p35, 0, %s34
      %s37 = sadd.s32 1, %s28
      %s38 = scalar_select %p35, %s37, %s28
      %p39 = scmp.ge.s32.totalorder %s38, 2
      %s40 = scalar_select %p39, 0, %s38
      %s41 = ssub.s32 %s28, %s40
      %p42 = scmp.eq.s32.totalorder %s41, 0
      %s44 = sadd.s32 %s43, 1
      %s45 = scalar_select %p42, %s43, %s44
      %p48 = pneg %p42
      %p49 = scmp.eq.s32.totalorder %s21, 1
      %p50 = por %p48, %p49
      %p51 = scmp.ne.s32.totalorder %s43, %s46
      %p52 = scmp.eq.s32.totalorder %s21, 0
      %p53 = por %p51, %p52
      %p54 = scmp.ne.s32.totalorder %s43, %s46
      %p55 = scmp.eq.s32.totalorder %s26, 1
      %p56 = por %p54, %p55
      %p57 = scmp.ne.s32.totalorder %s46, %s47
      %p58 = scmp.eq.s32.totalorder %s26, 0
      %p59 = por %p57, %p58
      %p60 = scmp.ne.s32.totalorder %s46, %s47
      %p61 = scmp.eq.s32.totalorder %s27, 1
      %p62 = por %p60, %p61
      %p64 = scmp.ne.s32.totalorder %s47, %s63
      %p65 = scmp.eq.s32.totalorder %s27, 0
      %p66 = por %p64, %p65
      %s67 = ssub.s32 %s29, %s36
      %p68 = scmp.eq.s32.totalorder %s67, 0
      %s70 = sadd.s32 %s69, 1
      %s71 = scalar_select %p68, %s69, %s70
      %p74 = pneg %p68
      %p75 = scmp.eq.s32.totalorder %s21, 1
      %p76 = por %p74, %p75
      %p77 = scmp.ne.s32.totalorder %s69, %s72
      %p78 = scmp.eq.s32.totalorder %s21, 0
      %p79 = por %p77, %p78
      %p80 = scmp.ne.s32.totalorder %s69, %s72
      %p81 = scmp.eq.s32.totalorder %s26, 1
      %p82 = por %p80, %p81
      %p83 = scmp.ne.s32.totalorder %s72, %s73
      %p84 = scmp.eq.s32.totalorder %s26, 0
      %p85 = por %p83, %p84
      %p86 = scmp.ne.s32.totalorder %s72, %s73
      %p87 = scmp.eq.s32.totalorder %s27, 1
      %p88 = por %p86, %p87
      %p90 = scmp.ne.s32.totalorder %s73, %s89
      %p91 = scmp.eq.s32.totalorder %s27, 0
      %p92 = por %p90, %p91
      %s93 = ssub.s32 %s29, %s36
      %p94 = scmp.eq.s32.totalorder %s93, 0
      %s96 = sadd.s32 %s95, 1
      %s97 = scalar_select %p94, %s95, %s96
      %p100 = pneg %p94
      %p101 = scmp.eq.s32.totalorder %s21, 1
      %p102 = por %p100, %p101
      %p103 = scmp.ne.s32.totalorder %s95, %s98
      %p104 = scmp.eq.s32.totalorder %s21, 0
      %p105 = por %p103, %p104
      %p106 = scmp.ne.s32.totalorder %s95, %s98
      %p107 = scmp.eq.s32.totalorder %s26, 1
      %p108 = por %p106, %p107
      %p109 = scmp.ne.s32.totalorder %s98, %s99
      %p110 = scmp.eq.s32.totalorder %s26, 0
      %p111 = por %p109, %p110
      %p112 = scmp.ne.s32.totalorder %s98, %s99
      %p113 = scmp.eq.s32.totalorder %s27, 1
      %p114 = por %p112, %p113
      %p116 = scmp.ne.s32.totalorder %s99, %s115
      %p117 = scmp.eq.s32.totalorder %s27, 0
      %p118 = por %p116, %p117
      %s119 = ssub.s32 %s29, %s36
      %p120 = scmp.eq.s32.totalorder %s119, 0
      %s122 = sadd.s32 %s121, 1
      %s123 = scalar_select %p120, %s121, %s122
      %p126 = pneg %p120
      %p127 = scmp.eq.s32.totalorder %s21, 1
      %p128 = por %p126, %p127
      %p129 = scmp.ne.s32.totalorder %s121, %s124
      %p130 = scmp.eq.s32.totalorder %s21, 0
      %p131 = por %p129, %p130
      %p132 = scmp.ne.s32.totalorder %s121, %s124
      %p133 = scmp.eq.s32.totalorder %s26, 1
      %p134 = por %p132, %p133
      %p135 = scmp.ne.s32.totalorder %s124, %s125
      %p136 = scmp.eq.s32.totalorder %s26, 0
      %p137 = por %p135, %p136
      %p138 = scmp.ne.s32.totalorder %s124, %s125
      %p139 = scmp.eq.s32.totalorder %s27, 1
      %p140 = por %p138, %p139
      %p142 = scmp.ne.s32.totalorder %s125, %s141
      %p143 = scmp.eq.s32.totalorder %s27, 0
      %p144 = por %p142, %p143
      %s146 = sadd.s32 %s145, 1
      %p149 = scmp.eq.s32.totalorder %s21, 1
      %p150 = scmp.ne.s32.totalorder %s145, %s147
      %p151 = scmp.eq.s32.totalorder %s21, 0
      %p152 = por %p150, %p151
      %p153 = scmp.ne.s32.totalorder %s145, %s147
      %p154 = scmp.eq.s32.totalorder %s26, 1
      %p155 = por %p153, %p154
      %p156 = scmp.ne.s32.totalorder %s147, %s148
      %p157 = scmp.eq.s32.totalorder %s26, 0
      %p158 = por %p156, %p157
      %p159 = scmp.ne.s32.totalorder %s147, %s148
      %p160 = scmp.eq.s32.totalorder %s27, 1
      %p161 = por %p159, %p160
      %p163 = scmp.ne.s32.totalorder %s148, %s162
      %p164 = scmp.eq.s32.totalorder %s27, 0
      %p165 = por %p163, %p164
      %s167 = sadd.s32 %s166, 1
      %p170 = scmp.eq.s32.totalorder %s21, 1
      %p171 = scmp.ne.s32.totalorder %s166, %s168
      %p172 = scmp.eq.s32.totalorder %s21, 0
      %p173 = por %p171, %p172
      %p174 = scmp.ne.s32.totalorder %s166, %s168
      %p175 = scmp.eq.s32.totalorder %s26, 1
      %p176 = por %p174, %p175
      %p177 = scmp.ne.s32.totalorder %s168, %s169
      %p178 = scmp.eq.s32.totalorder %s26, 0
      %p179 = por %p177, %p178
      %p180 = scmp.ne.s32.totalorder %s168, %s169
      %p181 = scmp.eq.s32.totalorder %s27, 1
      %p182 = por %p180, %p181
      %p184 = scmp.ne.s32.totalorder %s169, %s183
      %p185 = scmp.eq.s32.totalorder %s27, 0
      %p186 = por %p184, %p185
      %s188 = sadd.s32 %s187, 1
      %p191 = scmp.eq.s32.totalorder %s21, 1
      %p192 = scmp.ne.s32.totalorder %s187, %s189
      %p193 = scmp.eq.s32.totalorder %s21, 0
      %p194 = por %p192, %p193
      %p195 = scmp.ne.s32.totalorder %s187, %s189
      %p196 = scmp.eq.s32.totalorder %s26, 1
      %p197 = por %p195, %p196
      %p198 = scmp.ne.s32.totalorder %s189, %s190
      %p199 = scmp.eq.s32.totalorder %s26, 0
      %p200 = por %p198, %p199
      %p201 = scmp.ne.s32.totalorder %s189, %s190
      %p202 = scmp.eq.s32.totalorder %s27, 1
      %p203 = por %p201, %p202
      %p205 = scmp.ne.s32.totalorder %s190, %s204
      %p206 = scmp.eq.s32.totalorder %s27, 0
      %p207 = por %p205, %p206
      %s208 = ssub.s32 %s28, %s40
      %p209 = scmp.eq.s32.totalorder %s208, 0
      %s211 = sadd.s32 %s210, 1
      %s212 = scalar_select %p209, %s210, %s211
      %p215 = pneg %p209
      %p216 = scmp.eq.s32.totalorder %s21, 1
      %p217 = por %p215, %p216
      %p218 = scmp.ne.s32.totalorder %s210, %s213
      %p219 = scmp.eq.s32.totalorder %s21, 0
      %p220 = por %p218, %p219
      %p221 = scmp.ne.s32.totalorder %s210, %s213
      %p222 = scmp.eq.s32.totalorder %s26, 1
      %p223 = por %p221, %p222
      %p224 = scmp.ne.s32.totalorder %s213, %s214
      %p225 = scmp.eq.s32.totalorder %s26, 0
      %p226 = por %p224, %p225
      %p227 = scmp.ne.s32.totalorder %s213, %s214
      %p228 = scmp.eq.s32.totalorder %s27, 1
      %p229 = por %p227, %p228
      %p231 = scmp.ne.s32.totalorder %s214, %s230
      %p232 = scmp.eq.s32.totalorder %s27, 0
      %p233 = por %p231, %p232
      %p234 = scmp.le.s32.totalorder 1, %s21
      %p235 = scmp.lt.s32.totalorder %s21, 3
      %p236 = pnand %p234, %p235
      %p237 = pneg %p236
      // Predicated region
      $region9: #{tpu_custom_call.1} parent=5 // pred_check
        _
      $region10: #{tpu_custom_call.1} parent=5 // pred_check_branch
        %239 = sbr.rel (%p236) target = $region12
      $region11: #{tpu_custom_call.1} parent=5 // pred_region
        %s240 = ssub.s32 %s21, 1
        // Predicated region
        $region13: #{tpu_custom_call.1} parent=11 // pred_check
          %p241 = pneg %p85
        $region14: #{tpu_custom_call.1} parent=11 // pred_check_branch
          %243 = sbr.rel (%p241) target = $region16
        $region15: #{tpu_custom_call.1} parent=11 // pred_region
          %s244 = smul.u32 2, %s31
          %246 = vsyncadd [#allocation7], 0
          %s247 = smul.addr %s244, 4
          %s248 = scalar_lea.hbm %s1, %s247
          %s249 = sshll.u32 %s248, 4
          %s250 = int_to_ptr.hbm [resolvable:$true] %s249
          %s251 = sshll.u32 [#allocation6], 4
          %s252 = int_to_ptr.vmem [resolvable:$true] %s251
          %257 = dma.hbm_to_vmem [thread:$0]  %s250, 2048, %s252, [#allocation7], 128, 128, 8
        $region16: #{tpu_custom_call.1} parent=11 // pred_fallthru
          _
        // Predicated region
        $region17: #{tpu_custom_call.1} parent=11 // pred_check
          %p258 = pneg %p111
        $region18: #{tpu_custom_call.1} parent=11 // pred_check_branch
          %260 = sbr.rel (%p258) target = $region20
        $region19: #{tpu_custom_call.1} parent=11 // pred_region
          %s261 = smul.u32 2, %s31
          %263 = vsyncadd [#allocation7], 0
          %s264 = scalar_lea.hbm %s2, %s261
          %s266 = sshll.u32 %s264, 4
          %s267 = int_to_ptr.hbm [resolvable:$true] %s266
          %s268 = sshll.u32 [#allocation8], 4
          %s269 = int_to_ptr.vmem [resolvable:$true] %s268
          %271 = dma.hbm_to_vmem [thread:$0]  %s267, 32, %s269, [#allocation7]
        $region20: #{tpu_custom_call.1} parent=11 // pred_fallthru
          _
        // Predicated region
        $region21: #{tpu_custom_call.1} parent=11 // pred_check
          %p272 = pneg %p137
        $region22: #{tpu_custom_call.1} parent=11 // pred_check_branch
          %274 = sbr.rel (%p272) target = $region24
        $region23: #{tpu_custom_call.1} parent=11 // pred_region
          %s275 = smul.u32 32, %s31
          %277 = vsyncadd [#allocation10], 0
          %s278 = smul.addr %s275, 4
          %s279 = scalar_lea.hbm %s3, %s278
          %s280 = sshll.u32 %s279, 4
          %s281 = int_to_ptr.hbm [resolvable:$true] %s280
          %s282 = sshll.u32 [#allocation9], 4
          %s283 = int_to_ptr.vmem [resolvable:$true] %s282
          %288 = dma.hbm_to_vmem [thread:$0]  %s281, 2048, %s283, [#allocation10], 64, 64, 4
        $region24: #{tpu_custom_call.1} parent=11 // pred_fallthru
          _
        // Predicated region
        $region25: #{tpu_custom_call.1} parent=11 // pred_check
          %p289 = pneg %p158
        $region26: #{tpu_custom_call.1} parent=11 // pred_check_branch
          %291 = sbr.rel (%p289) target = $region28
        $region27: #{tpu_custom_call.1} parent=11 // pred_region
          _
        $region28: #{tpu_custom_call.1} parent=11 // pred_fallthru
          _
        // Predicated region
        $region29: #{tpu_custom_call.1} parent=11 // pred_check
          %p292 = pneg %p179
        $region30: #{tpu_custom_call.1} parent=11 // pred_check_branch
          %294 = sbr.rel (%p292) target = $region32
        $region31: #{tpu_custom_call.1} parent=11 // pred_region
          _
        $region32: #{tpu_custom_call.1} parent=11 // pred_fallthru
          _
        // Predicated region
        $region33: #{tpu_custom_call.1} parent=11 // pred_check
          %p295 = pneg %p200
        $region34: #{tpu_custom_call.1} parent=11 // pred_check_branch
          %297 = sbr.rel (%p295) target = $region36
        $region35: #{tpu_custom_call.1} parent=11 // pred_region
          _
        $region36: #{tpu_custom_call.1} parent=11 // pred_fallthru
          _
      $region12: #{tpu_custom_call.1} parent=5 // pred_fallthru
        _
      %p298 = scmp.lt.s32.totalorder %s21, 2
      // Predicated region
      $region37: #{tpu_custom_call.1} parent=5 // pred_check
        %p299 = pneg %p298
      $region38: #{tpu_custom_call.1} parent=5 // pred_check_branch
        %301 = sbr.rel (%p299) target = $region40
      $region39: #{tpu_custom_call.1} parent=5 // pred_region
        // Predicated region
        $region41: #{tpu_custom_call.1} parent=39 // pred_check
          %p302 = pneg %p53
        $region42: #{tpu_custom_call.1} parent=39 // pred_check_branch
          %304 = sbr.rel (%p302) target = $region44
        $region43: #{tpu_custom_call.1} parent=39 // pred_region
          %s305 = sand.u32 %s43, 1
          %s306 = scalar_lea.sflag [#allocation4], %s305
          %s307 = sand.u32 %s43, 1
          %s308 = smul.addr %s307, 8
          %s309 = scalar_lea.vmem [#allocation3], %s308
          %311 = vsyncadd %s306, 0
          %s312 = smul.addr %s28, 8
          %s313 = scalar_lea.hbm %s0, %s312
          %s315 = sshll.u32 %s313, 4
          %s316 = int_to_ptr.hbm [resolvable:$true] %s315
          %s317 = sshll.u32 %s309, 4
          %s318 = int_to_ptr.vmem [resolvable:$true] %s317
          %320 = dma.hbm_to_vmem [thread:$0]  %s316, 128, %s318, %s306
        $region44: #{tpu_custom_call.1} parent=39 // pred_fallthru
          _
      $region40: #{tpu_custom_call.1} parent=5 // pred_fallthru
        _
      %p321 = scmp.le.s32.totalorder 1, %s21
      %p322 = scmp.lt.s32.totalorder %s21, 3
      %p323 = pnand %p321, %p322
      %p324 = pneg %p323
      // Predicated region
      $region45: #{tpu_custom_call.1} parent=5 // pred_check
        _
      $region46: #{tpu_custom_call.1} parent=5 // pred_check_branch
        %326 = sbr.rel (%p323) target = $region48
      $region47: #{tpu_custom_call.1} parent=5 // pred_region
        %s327 = ssub.s32 %s21, 1
        %s328 = sand.u32 %s46, 1
        %s329 = scalar_lea.sflag [#allocation4], %s328
        %s330 = sand.u32 %s46, 1
        %s331 = smul.addr %s330, 8
        %s332 = scalar_lea.vmem [#allocation3], %s331
        // Predicated region
        $region49: #{tpu_custom_call.1} parent=47 // pred_check
          %p333 = pneg %p59
        $region50: #{tpu_custom_call.1} parent=47 // pred_check_branch
          %335 = sbr.rel (%p333) target = $region52
        $region51: #{tpu_custom_call.1} parent=47 // pred_region
          %337 = dma.done %s329, 128
        $region52: #{tpu_custom_call.1} parent=47 // pred_fallthru
          _
        // Predicated region
        $region53: #{tpu_custom_call.1} parent=47 // pred_check
          %p338 = pneg %p85
        $region54: #{tpu_custom_call.1} parent=47 // pred_check_branch
          %340 = sbr.rel (%p338) target = $region56
        $region55: #{tpu_custom_call.1} parent=47 // pred_region
          %342 = dma.done [#allocation7], 2048
        $region56: #{tpu_custom_call.1} parent=47 // pred_fallthru
          _
        // Predicated region
        $region57: #{tpu_custom_call.1} parent=47 // pred_check
          %p343 = pneg %p111
        $region58: #{tpu_custom_call.1} parent=47 // pred_check_branch
          %345 = sbr.rel (%p343) target = $region60
        $region59: #{tpu_custom_call.1} parent=47 // pred_region
          %347 = dma.done [#allocation7], 32
        $region60: #{tpu_custom_call.1} parent=47 // pred_fallthru
          _
        // Predicated region
        $region61: #{tpu_custom_call.1} parent=47 // pred_check
          %p348 = pneg %p137
        $region62: #{tpu_custom_call.1} parent=47 // pred_check_branch
          %350 = sbr.rel (%p348) target = $region64
        $region63: #{tpu_custom_call.1} parent=47 // pred_region
          %352 = dma.done [#allocation10], 2048
        $region64: #{tpu_custom_call.1} parent=47 // pred_fallthru
          _
        %s353 = sand.u32 %s46, 1
        %s354 = scalar_lea.sflag [#allocation4], %s353
        %s355 = sand.u32 %s46, 1
        %s356 = smul.addr %s355, 8
        %s357 = scalar_lea.vmem [#allocation3], %s356
        %p358 = pneg %p59
        %p359 = pneg %p56
        %p360 = pneg %p85
        %p361 = pneg %p82
        %p362 = pneg %p111
        %p363 = pneg %p108
        %p364 = pneg %p137
        %p365 = pneg %p134
        %p366 = pneg %p158
        %p367 = pneg %p155
        %p368 = pneg %p179
        %p369 = pneg %p176
        %p370 = pneg %p200
        %p371 = pneg %p197
        %p372 = pneg %p226
        %p373 = pneg %p223
        %s374 = sand.u32 %s213, 1
        %s375 = scalar_lea.sflag [#allocation5], %s374
        %s376 = sand.u32 %s213, 1
        %s377 = smul.addr %s376, 8
        %s378 = scalar_lea.vmem [#allocation11], %s377
        %s379 = smul.u32 2, %s31
        %s380 = smul.u32 2, %s31
        %s381 = smul.u32 32, %s31
        %p382 = scmp.eq.s32.totalorder %s31, 0
        // Predicated region
        $region65: #{tpu_custom_call.1} parent=47 // pred_check
          %p383 = pneg %p382
        $region66: #{tpu_custom_call.1} parent=47 // pred_check_branch
          %385 = sbr.rel (%p383) target = $region68
        $region67: #{tpu_custom_call.1} parent=47 // pred_region
          %386 = vst [vmem:[#allocation2] sm:$0xff] 0.0
        $region68: #{tpu_custom_call.1} parent=47 // pred_fallthru
          _
        %v387 = vld [vmem:[%s332] sm:$0xff]
        %v388 = vpack.c.bf16 %v387, %v387
        %v389 = vld [vmem:[#allocation6] sm:$0xff]
        %v390 = vld [vmem:[#allocation6 + $0x8] sm:$0xff]
        %v391 = vld [vmem:[#allocation6 + $0x10] sm:$0xff]
        %v392 = vld [vmem:[#allocation6 + $0x18] sm:$0xff]
        %v393 = vld [vmem:[#allocation6 + $0x20] sm:$0xff]
        %v394 = vld [vmem:[#allocation6 + $0x28] sm:$0xff]
        %v395 = vld [vmem:[#allocation6 + $0x30] sm:$0xff]
        %v396 = vld [vmem:[#allocation6 + $0x38] sm:$0xff]
        %v397 = vld [vmem:[#allocation6 + $0x40] sm:$0xff]
        %v398 = vld [vmem:[#allocation6 + $0x48] sm:$0xff]
        %v399 = vld [vmem:[#allocation6 + $0x50] sm:$0xff]
        %v400 = vld [vmem:[#allocation6 + $0x58] sm:$0xff]
        %v401 = vld [vmem:[#allocation6 + $0x60] sm:$0xff]
        %v402 = vld [vmem:[#allocation6 + $0x68] sm:$0xff]
        %v403 = vld [vmem:[#allocation6 + $0x70] sm:$0xff]
        %v404 = vld [vmem:[#allocation6 + $0x78] sm:$0xff]
        %v405 = vld [vmem:[#allocation8] sm:$0x3]
        %v407 = vperm.slane %v405, 0
        %v408 = vperm.slane %v405, 1
        %v427 = vunpack.c.l.b16 %v389
        %v428 = vunpack.c.h.b16 %v389
        %v429 = vunpack.c.l.b16 %v390
        %v430 = vunpack.c.h.b16 %v390
        %v431 = vunpack.c.l.b16 %v391
        %v432 = vunpack.c.h.b16 %v391
        %v433 = vunpack.c.l.b16 %v392
        %v434 = vunpack.c.h.b16 %v392
        %v435 = vunpack.c.l.b16 %v393
        %v436 = vunpack.c.h.b16 %v393
        %v437 = vunpack.c.l.b16 %v394
        %v438 = vunpack.c.h.b16 %v394
        %v439 = vunpack.c.l.b16 %v395
        %v440 = vunpack.c.h.b16 %v395
        %v441 = vunpack.c.l.b16 %v396
        %v442 = vunpack.c.h.b16 %v396
        %v443 = vunpack.c.l.b16 %v397
        %v444 = vunpack.c.h.b16 %v397
        %v445 = vunpack.c.l.b16 %v398
        %v446 = vunpack.c.h.b16 %v398
        %v447 = vunpack.c.l.b16 %v399
        %v448 = vunpack.c.h.b16 %v399
        %v449 = vunpack.c.l.b16 %v400
        %v450 = vunpack.c.h.b16 %v400
        %v451 = vunpack.c.l.b16 %v401
        %v452 = vunpack.c.h.b16 %v401
        %v453 = vunpack.c.l.b16 %v402
        %v454 = vunpack.c.h.b16 %v402
        %v455 = vunpack.c.l.b16 %v403
        %v456 = vunpack.c.h.b16 %v403
        %v457 = vunpack.c.l.b16 %v404
        %v458 = vunpack.c.h.b16 %v404
        %v459 = vpack.c.b16 %v429, %v427
        %v460 = vpack.c.b16 %v430, %v428
        %v461 = vpack.c.b16 %v433, %v431
        %v462 = vpack.c.b16 %v434, %v432
        %v463 = vpack.c.b16 %v437, %v435
        %v464 = vpack.c.b16 %v438, %v436
        %v465 = vpack.c.b16 %v441, %v439
        %v466 = vpack.c.b16 %v442, %v440
        %v467 = vpack.c.b16 %v445, %v443
        %v468 = vpack.c.b16 %v446, %v444
        %v469 = vpack.c.b16 %v449, %v447
        %v470 = vpack.c.b16 %v450, %v448
        %v471 = vpack.c.b16 %v453, %v451
        %v472 = vpack.c.b16 %v454, %v452
        %v473 = vpack.c.b16 %v457, %v455
        %v474 = vpack.c.b16 %v458, %v456
        %491 = vmatpush.bf16.msra.mxu0 %v473
        %492 = vmatpush.bf16.msra.mxu0 %v471
        %493 = vmatpush.bf16.msra.mxu0 %v469
        %494 = vmatpush.bf16.msra.mxu0 %v467
        %495 = vmatpush.bf16.msra.mxu0 %v465
        %496 = vmatpush.bf16.msra.mxu0 %v463
        %497 = vmatpush.bf16.msra.mxu0 %v461
        %498 = vmatpush.bf16.msra.mxu0 %v459
        %499 = vmatmul.bf16.gmra.mxu0 %v388
        %v500 = vpop.f32.mrf.mxu0
        %v501 = vadd.f32 %v407, %v500
        %v502 = vpop.f32.mrf.mxu0
        %503 = vdwg.mxu0
        %504 = vmatpush.bf16.msra.mxu0 %v474
        %505 = vmatpush.bf16.msra.mxu0 %v472
        %506 = vmatpush.bf16.msra.mxu0 %v470
        %507 = vmatpush.bf16.msra.mxu0 %v468
        %508 = vmatpush.bf16.msra.mxu0 %v466
        %509 = vmatpush.bf16.msra.mxu0 %v464
        %510 = vmatpush.bf16.msra.mxu0 %v462
        %511 = vmatpush.bf16.msra.mxu0 %v460
        %512 = vmatmul.bf16.gmra.mxu0 %v388
        %v513 = vpop.f32.mrf.mxu0
        %v514 = vadd.f32 %v408, %v513
        %v515 = vpop.f32.mrf.mxu0
        %516 = vdwg.mxu0
        %v517 = vmax.f32 %v501, 0.0
        %v518 = vmax.f32 %v514, 0.0
        %v519 = vld [vmem:[#allocation2] sm:$0xff]
        %v520 = vpack.c.bf16 %v517, %v517
        %v521 = vpack.c.bf16 %v518, %v518
        %v522 = vld [vmem:[#allocation9] sm:$0xf]
        %v523 = vld [vmem:[#allocation9 + $0x4] sm:$0xf]
        %v524 = vld [vmem:[#allocation9 + $0x8] sm:$0xf]
        %v525 = vld [vmem:[#allocation9 + $0xc] sm:$0xf]
        %v526 = vld [vmem:[#allocation9 + $0x10] sm:$0xf]
        %v527 = vld [vmem:[#allocation9 + $0x14] sm:$0xf]
        %v528 = vld [vmem:[#allocation9 + $0x18] sm:$0xf]
        %v529 = vld [vmem:[#allocation9 + $0x1c] sm:$0xf]
        %v530 = vld [vmem:[#allocation9 + $0x20] sm:$0xf]
        %v531 = vld [vmem:[#allocation9 + $0x24] sm:$0xf]
        %v532 = vld [vmem:[#allocation9 + $0x28] sm:$0xf]
        %v533 = vld [vmem:[#allocation9 + $0x2c] sm:$0xf]
        %v534 = vld [vmem:[#allocation9 + $0x30] sm:$0xf]
        %v535 = vld [vmem:[#allocation9 + $0x34] sm:$0xf]
        %v536 = vld [vmem:[#allocation9 + $0x38] sm:$0xf]
        %v537 = vld [vmem:[#allocation9 + $0x3c] sm:$0xf]
        %v538 = vld [vmem:[#allocation9 + $0x40] sm:$0xf]
        %v539 = vld [vmem:[#allocation9 + $0x44] sm:$0xf]
        %v540 = vld [vmem:[#allocation9 + $0x48] sm:$0xf]
        %v541 = vld [vmem:[#allocation9 + $0x4c] sm:$0xf]
        %v542 = vld [vmem:[#allocation9 + $0x50] sm:$0xf]
        %v543 = vld [vmem:[#allocation9 + $0x54] sm:$0xf]
        %v544 = vld [vmem:[#allocation9 + $0x58] sm:$0xf]
        %v545 = vld [vmem:[#allocation9 + $0x5c] sm:$0xf]
        %v546 = vld [vmem:[#allocation9 + $0x60] sm:$0xf]
        %v547 = vld [vmem:[#allocation9 + $0x64] sm:$0xf]
        %v548 = vld [vmem:[#allocation9 + $0x68] sm:$0xf]
        %v549 = vld [vmem:[#allocation9 + $0x6c] sm:$0xf]
        %v550 = vld [vmem:[#allocation9 + $0x70] sm:$0xf]
        %v551 = vld [vmem:[#allocation9 + $0x74] sm:$0xf]
        %v552 = vld [vmem:[#allocation9 + $0x78] sm:$0xf]
        %v553 = vld [vmem:[#allocation9 + $0x7c] sm:$0xf]
        %v586 = vunpack.c.l.b16 %v522
        %v587 = vunpack.c.l.b16 %v523
        %v588 = vunpack.c.l.b16 %v524
        %v589 = vunpack.c.l.b16 %v525
        %v590 = vunpack.c.l.b16 %v526
        %v591 = vunpack.c.l.b16 %v527
        %v592 = vunpack.c.l.b16 %v528
        %v593 = vunpack.c.l.b16 %v529
        %v594 = vunpack.c.l.b16 %v530
        %v595 = vunpack.c.l.b16 %v531
        %v596 = vunpack.c.l.b16 %v532
        %v597 = vunpack.c.l.b16 %v533
        %v598 = vunpack.c.l.b16 %v534
        %v599 = vunpack.c.l.b16 %v535
        %v600 = vunpack.c.l.b16 %v536
        %v601 = vunpack.c.l.b16 %v537
        %v602 = vunpack.c.l.b16 %v538
        %v603 = vunpack.c.l.b16 %v539
        %v604 = vunpack.c.l.b16 %v540
        %v605 = vunpack.c.l.b16 %v541
        %v606 = vunpack.c.l.b16 %v542
        %v607 = vunpack.c.l.b16 %v543
        %v608 = vunpack.c.l.b16 %v544
        %v609 = vunpack.c.l.b16 %v545
        %v610 = vunpack.c.l.b16 %v546
        %v611 = vunpack.c.l.b16 %v547
        %v612 = vunpack.c.l.b16 %v548
        %v613 = vunpack.c.l.b16 %v549
        %v614 = vunpack.c.l.b16 %v550
        %v615 = vunpack.c.l.b16 %v551
        %v616 = vunpack.c.l.b16 %v552
        %v617 = vunpack.c.l.b16 %v553
        %v618 = vpack.c.b16 %v587, %v586
        %v619 = vpack.c.b16 %v589, %v588
        %v620 = vpack.c.b16 %v591, %v590
        %v621 = vpack.c.b16 %v593, %v592
        %v622 = vpack.c.b16 %v595, %v594
        %v623 = vpack.c.b16 %v597, %v596
        %v624 = vpack.c.b16 %v599, %v598
        %v625 = vpack.c.b16 %v601, %v600
        %v626 = vpack.c.b16 %v603, %v602
        %v627 = vpack.c.b16 %v605, %v604
        %v628 = vpack.c.b16 %v607, %v606
        %v629 = vpack.c.b16 %v609, %v608
        %v630 = vpack.c.b16 %v611, %v610
        %v631 = vpack.c.b16 %v613, %v612
        %v632 = vpack.c.b16 %v615, %v614
        %v633 = vpack.c.b16 %v617, %v616
        %650 = vmatpush.bf16.msra.mxu0 %v625
        %651 = vmatpush.bf16.msra.mxu0 %v624
        %652 = vmatpush.bf16.msra.mxu0 %v623
        %653 = vmatpush.bf16.msra.mxu0 %v622
        %654 = vmatpush.bf16.msra.mxu0 %v621
        %655 = vmatpush.bf16.msra.mxu0 %v620
        %656 = vmatpush.bf16.msra.mxu0 %v619
        %657 = vmatpush.bf16.msra.mxu0 %v618
        %658 = vmatmul.bf16.gmra.mxu0 %v520
        %v659 = vpop.f32.mrf.mxu0
        %v660 = vadd.f32 0.0, %v659
        %v661 = vpop.f32.mrf.mxu0
        %662 = vdwg.mxu0
        %663 = vmatpush.bf16.msra.mxu0 %v633
        %664 = vmatpush.bf16.msra.mxu0 %v632
        %665 = vmatpush.bf16.msra.mxu0 %v631
        %666 = vmatpush.bf16.msra.mxu0 %v630
        %667 = vmatpush.bf16.msra.mxu0 %v629
        %668 = vmatpush.bf16.msra.mxu0 %v628
        %669 = vmatpush.bf16.msra.mxu0 %v627
        %670 = vmatpush.bf16.msra.mxu0 %v626
        %671 = vmatmul.bf16.gmra.mxu0 %v521
        %v672 = vpop.f32.mrf.mxu0
        %v673 = vadd.f32 %v660, %v672
        %v674 = vpop.f32.mrf.mxu0
        %675 = vdwg.mxu0
        %v676 = vadd.f32 %v519, %v673
        %677 = vst [vmem:[#allocation2] sm:$0xff] %v676
        // Predicated region
        $region69: #{tpu_custom_call.1} parent=47 // pred_check
          %p678 = pneg %p382
        $region70: #{tpu_custom_call.1} parent=47 // pred_check_branch
          %680 = sbr.rel (%p678) target = $region72
        $region71: #{tpu_custom_call.1} parent=47 // pred_region
          %v681 = vld [vmem:[#allocation2] sm:$0xff]
          %v682 = vld [vmem:[%s4] sm:$0x1]
          %v684 = vperm.slane %v682, 0
          %v686 = vadd.f32 %v681, %v684
          %v687 = vadd.f32 %v686, %v387
          %688 = vadd.xlane.f32.xlu0 %v687
          %v689 = vpop.xlane.xlu0 %688
          %v690 = vrcp.pop 128.0
          %v691 = vmul.f32 128.0, %v690
          %v692 = vsub.f32 1.0, %v691
          %v693 = vmul.f32 %v690, %v692
          %v694 = vadd.f32 %v690, %v693
          %vm695 = vweird.f32 %v690
          %v696 = vsel %vm695, %v690, %v694
          %v697 = vmul.f32 %v689, %v696
          %v698 = vsub.f32 %v687, %v697
          %v699 = vmul.f32 %v698, %v698
          %700 = vadd.xlane.f32.xlu0 %v699
          %v701 = vpop.xlane.xlu0 %700
          %v702 = vmul.f32 %v701, %v696
          %v703 = vadd.f32 %v702, 1e-05
          %v704 = vrsqrt.pop %v703
          %v705 = vmul.f32 %v704, %v703
          %v706 = vmul.f32 %v705, %v704
          %v707 = vmul.f32 0.5, %v706
          %v708 = vsub.f32 1.5, %v707
          %v709 = vmul.f32 %v704, %v708
          %vm710 = vweird.f32 %v703
          %vm711 = vweird.f32 %v704
          %vm712 = vmor %vm710, %vm711
          %v713 = vsel %vm712, %v704, %v709
          %v714 = vmul.f32 %v698, %v713
          %v715 = vld [vmem:[%s5] sm:$0x1]
          %v717 = vperm.slane %v715, 0
          %v719 = vmul.f32 %v714, %v717
          %v720 = vld [vmem:[%s6] sm:$0x1]
          %v722 = vperm.slane %v720, 0
          %v724 = vadd.f32 %v719, %v722
          %725 = vst [vmem:[%s378] sm:$0xff] %v724
        $region72: #{tpu_custom_call.1} parent=47 // pred_fallthru
          _
        %s726 = sand.u32 %s213, 1
        %s727 = scalar_lea.sflag [#allocation5], %s726
        %s728 = sand.u32 %s213, 1
        %s729 = smul.addr %s728, 8
        %s730 = scalar_lea.vmem [#allocation11], %s729
        // Predicated region
        $region73: #{tpu_custom_call.1} parent=47 // pred_check
          %p731 = pneg %p223
        $region74: #{tpu_custom_call.1} parent=47 // pred_check_branch
          %733 = sbr.rel (%p731) target = $region76
        $region75: #{tpu_custom_call.1} parent=47 // pred_region
          %735 = vsyncadd %s727, 0
          %s736 = smul.addr %s30, 8
          %s737 = scalar_lea.hbm %s7, %s736
          %s739 = sshll.u32 %s730, 4
          %s740 = int_to_ptr.vmem [resolvable:$true] %s739
          %s741 = sshll.u32 %s737, 4
          %s742 = int_to_ptr.hbm [resolvable:$true] %s741
          %744 = dma.vmem_to_hbm [thread:$0]  %s740, 128, %s742, %s727
        $region76: #{tpu_custom_call.1} parent=47 // pred_fallthru
          _
      $region48: #{tpu_custom_call.1} parent=5 // pred_fallthru
        _
      %p745 = scmp.le.s32.totalorder 2, %s21
      // Predicated region
      $region77: #{tpu_custom_call.1} parent=5 // pred_check
        %p746 = pneg %p745
      $region78: #{tpu_custom_call.1} parent=5 // pred_check_branch
        %748 = sbr.rel (%p746) target = $region80
      $region79: #{tpu_custom_call.1} parent=5 // pred_region
        %s749 = ssub.s32 %s21, 2
        // Predicated region
        $region81: #{tpu_custom_call.1} parent=79 // pred_check
          %p750 = pneg %p229
        $region82: #{tpu_custom_call.1} parent=79 // pred_check_branch
          %752 = sbr.rel (%p750) target = $region84
        $region83: #{tpu_custom_call.1} parent=79 // pred_region
          %s753 = sand.u32 %s214, 1
          %s754 = scalar_lea.sflag [#allocation5], %s753
          %s755 = sand.u32 %s214, 1
          %s756 = smul.addr %s755, 8
          %s757 = scalar_lea.vmem [#allocation11], %s756
          %759 = dma.done %s754, 128
        $region84: #{tpu_custom_call.1} parent=79 // pred_fallthru
          _
      $region80: #{tpu_custom_call.1} parent=5 // pred_fallthru
        _
    $region6: #{tpu_custom_call.1} parent=1 // loop_footer
      %s25 = sadd.s32 1, %s21
    $region7: #{tpu_custom_call.1} parent=1 // loop_footer_branch
      %20 = sbr.rel target = $region3
    $region8: #{tpu_custom_call.1} parent=1 // loop_exit
      _
    %760 = vsyncpa [#allocation4], 1
    %s761 = scalar_lea.sflag [#allocation4], 1
    %762 = vsyncpa %s761, 1
    %763 = vsyncpa [#allocation7], 1
    %764 = vsyncpa [#allocation10], 1
    %765 = vsyncpa [#allocation5], 1
    %s766 = scalar_lea.sflag [#allocation5], 1
    %767 = vsyncpa %s766, 1

</llo_original>
